<compile_context>
chip_gen: v7x
topology: tpu7x:2x2x1
jax: 0.10.0
libtpu: 0.0.40
codegen_flags: <defaults>
</compile_context>

<pallas_src>
import math

import jax
import jax.numpy as jnp
from jax.experimental import pallas as pl
from jax.experimental.pallas import tpu as pltpu

DIM_IN = 256        # forced by pos2posemb in the original module: 4 * 64
HIDDEN = 128        # FFN hidden dim (synthetic, small)
NUM_QUERIES = 8
EPS_LN = 1e-5
_VEC_ROWS = 16      # packed per-feature-vector rows, padded to sublane multiple


# --------------------------------- Pallas kernel ------------------------------
def _layer_norm(x, g, b, eps=EPS_LN):
    mu = jnp.mean(x, axis=-1, keepdims=True)
    xc = x - mu
    var = jnp.mean(xc * xc, axis=-1, keepdims=True)
    return xc * jax.lax.rsqrt(var + eps) * g + b


def qim_kernel(embed_ref, feat_ref, wa_ref, wb_ref, vec_ref, out_ref):
    f32, bf16 = jnp.float32, jnp.bfloat16
    D, H = DIM_IN, HIDDEN

    embed = embed_ref[...]                                   # (N, D) f32

    # Packed per-feature vectors (one f32 (16, D) block; static slices).
    b_attn = vec_ref[0:1, :]
    b1 = vec_ref[1:2, 0:H]
    b2 = vec_ref[2:3, :]
    bf1 = vec_ref[3:4, 0:H]
    bf2 = vec_ref[4:5, :]
    g1, be1 = vec_ref[5:6, :], vec_ref[6:7, :]
    g2, be2 = vec_ref[7:8, :], vec_ref[8:9, :]
    gf, bef = vec_ref[9:10, :], vec_ref[10:11, :]

    # Packed bf16 weight slabs (static, 128-aligned lane slices).
    w_attn = wa_ref[:, 0:D]                  # (D, D) = wv_t @ wo_t folded offline
    w1 = wa_ref[:, D:D + H]                  # (D, H)
    wf1 = wa_ref[:, D + H:D + 2 * H]         # (D, H)
    w2 = wb_ref[:, 0:D]                      # (H, D)
    wf2 = wb_ref[:, D:2 * D]                 # (H, D)

    # Self-attention over a length-1 sequence: softmax == 1 exactly, so the
    # attention output is out_proj(v_proj(value)); q/k (pos-embed) are unused.
    # Only batch-row 0 of that output is consumed ([:, 0] in PyTorch), then
    # broadcast-added over all N rows.
    tgt2 = jnp.dot(embed[0:1, :].astype(bf16), w_attn,
                   preferred_element_type=f32) + b_attn      # (1, D)
    tgt = _layer_norm(embed + tgt2, g1, be1)                 # (N, D)

    # FFN branch: linear2(relu(linear1(tgt)))
    h = jnp.maximum(
        jnp.dot(tgt.astype(bf16), w1, preferred_element_type=f32) + b1, 0.0)
    tgt2 = jnp.dot(h.astype(bf16), w2, preferred_element_type=f32) + b2
    tgt = _layer_norm(tgt + tgt2, g2, be2)

    # Feature branch: linear_feat2(relu(linear_feat1(tgt))), residual on embeds_2_b
    hf = jnp.maximum(
        jnp.dot(tgt.astype(bf16), wf1, preferred_element_type=f32) + bf1, 0.0)
    qf2 = jnp.dot(hf.astype(bf16), wf2, preferred_element_type=f32) + bf2
    out_ref[...] = _layer_norm(feat_ref[...] + qf2, gf, bef)


# ----------------------------------- wrapper ----------------------------------
def qim_forward(track_queries, packed):
    # NOTE: query_pos = pos2posemb(inverse_sigmoid(pred_boxes_2)) is provably
    # dead (softmax over a single key == 1), so it is not computed at all.
    # TODO(synk): for production, batch many tracker states (N >= 128 rows) per
    # call to fill the 128/256-wide MXU; N=8 leaves it <6% utilized.
    embeds = track_queries["embeds_2"]                 # (1, N, D)
    feats = track_queries["embeds_2_b"]                # (1, N, D)
    _, n, d = embeds.shape

    embed2 = embeds.reshape(n, d).astype(jnp.float32)
    feat2 = feats.reshape(n, d).astype(jnp.float32)

    flops = 2 * (d * d + 4 * n * d * HIDDEN)           # attn row-0 fold + 2 FFNs
    bytes_accessed = ((packed["wa"].size + packed["wb"].size) * 2   # bf16 weights
                      + packed["vecs"].size * 4                     # packed vecs
                      + 3 * n * d * 4)                              # acts in/out

    vspec = pl.BlockSpec(memory_space=pltpu.MemorySpace.VMEM)
    out = pl.pallas_call(
        qim_kernel,
        out_shape=jax.ShapeDtypeStruct((n, d), jnp.float32),
        in_specs=[vspec] * 5,
        out_specs=vspec,
        compiler_params=pltpu.CompilerParams(vmem_limit_bytes=4 * 1024 * 1024),
        cost_estimate=pl.CostEstimate(
            flops=flops, transcendentals=3 * n, bytes_accessed=bytes_accessed),
    )(embed2, feat2, packed["wa"], packed["wb"], packed["vecs"])

    new_tq = dict(track_queries)
    new_tq["embeds_2"] = out.reshape(embeds.shape)
    return new_tq


# ------------------------------ parameter init --------------------------------
def init_params(key, dim_in=DIM_IN, hidden_dim=HIDDEN):
    """Raw f32 parameters matching the PyTorch module's init (xavier on 2-D)."""
    ks = jax.random.split(key, 10)

    def xavier(k, shape):                      # nn.init.xavier_uniform_ on (out, in)
        fan_out, fan_in = shape
        limit = math.sqrt(6.0 / (fan_in + fan_out))
        return jax.random.uniform(k, shape, jnp.float32, -limit, limit)

    # nn.MultiheadAttention in_proj_weight is (3D, D); only the value block
    # influences this forward (seq-len 1), MHA biases are zero after reset.
    in_proj_w = xavier(ks[0], (3 * dim_in, dim_in))
    wv = in_proj_w[2 * dim_in:]
    wo = xavier(ks[1], (dim_in, dim_in))
    w1 = xavier(ks[2], (hidden_dim, dim_in))
    w2 = xavier(ks[3], (dim_in, hidden_dim))
    wf1 = xavier(ks[4], (hidden_dim, dim_in))
    wf2 = xavier(ks[5], (dim_in, hidden_dim))

    def bias(k, nfeat, scale=0.02):
        return scale * jax.random.normal(k, (1, nfeat), jnp.float32)

    return {
        "wv_t": wv.T, "bv": jnp.zeros((1, dim_in), jnp.float32),
        "wo_t": wo.T, "bo": jnp.zeros((1, dim_in), jnp.float32),
        "w1_t": w1.T, "b1": bias(ks[6], hidden_dim),
        "w2_t": w2.T, "b2": bias(ks[7], dim_in),
        "wf1_t": wf1.T, "bf1": bias(ks[8], hidden_dim),
        "wf2_t": wf2.T, "bf2": bias(ks[9], dim_in),
        "ln1_g": jnp.ones((1, dim_in), jnp.float32),
        "ln1_b": jnp.zeros((1, dim_in), jnp.float32),
        "ln2_g": jnp.ones((1, dim_in), jnp.float32),
        "ln2_b": jnp.zeros((1, dim_in), jnp.float32),
        "lnf_g": jnp.ones((1, dim_in), jnp.float32),
        "lnf_b": jnp.zeros((1, dim_in), jnp.float32),
    }


def pack_params(raw, dim_in=DIM_IN, hidden_dim=HIDDEN):
    """Offline fold + packing into the 3 arrays the kernel actually consumes."""
    # Attention fold: out_proj(v_proj(x)) == x @ (wv_t @ wo_t) + (bv @ wo_t + bo)
    w_attn = raw["wv_t"] @ raw["wo_t"]                       # (D, D)
    b_attn = raw["bv"] @ raw["wo_t"] + raw["bo"]             # (1, D)

    wa = jnp.concatenate([w_attn, raw["w1_t"], raw["wf1_t"]], axis=1)   # (D, D+2H)
    wb = jnp.concatenate([raw["w2_t"], raw["wf2_t"]], axis=1)           # (H, 2D)

    def pad_lanes(v):
        return jnp.pad(v, ((0, 0), (0, dim_in - v.shape[1])))

    rows = [b_attn, pad_lanes(raw["b1"]), raw["b2"], pad_lanes(raw["bf1"]),
            raw["bf2"], raw["ln1_g"], raw["ln1_b"], raw["ln2_g"], raw["ln2_b"],
            raw["lnf_g"], raw["lnf_b"]]
    vecs = jnp.concatenate(rows, axis=0)                                # (11, D)
    vecs = jnp.pad(vecs, ((0, _VEC_ROWS - vecs.shape[0]), (0, 0)))      # (16, D)

    return {
        "wa": wa.astype(jnp.bfloat16),
        "wb": wb.astype(jnp.bfloat16),
        "vecs": vecs.astype(jnp.float32),
    }


# ------------------------------ jnp references ---------------------------------
def _ln_ref(x, g, b):
    mu = jnp.mean(x, -1, keepdims=True)
    xc = x - mu
    var = jnp.mean(xc * xc, -1, keepdims=True)
    return xc * jax.lax.rsqrt(var + EPS_LN) * g + b


def qim_reference_f32(track_queries, raw):
    """Original module math in f32 (eval mode; pos-embed path has no effect)."""
    out_embed = track_queries["embeds_2"]              # (1, N, D)
    feat = track_queries["embeds_2_b"]
    v = out_embed @ raw["wv_t"] + raw["bv"]
    attn = v @ raw["wo_t"] + raw["bo"]                 # (1, N, D)
    tgt2 = attn[:, 0]                                  # (1, D)  == [:, 0]
    tgt = _ln_ref(out_embed + tgt2, raw["ln1_g"], raw["ln1_b"])
    h = jnp.maximum(tgt @ raw["w1_t"] + raw["b1"], 0.0)
    tgt = _ln_ref(tgt + h @ raw["w2_t"] + raw["b2"], raw["ln2_g"], raw["ln2_b"])
    hf = jnp.maximum(tgt @ raw["wf1_t"] + raw["bf1"], 0.0)
    qf2 = hf @ raw["wf2_t"] + raw["bf2"]
    return _ln_ref(feat + qf2, raw["lnf_g"], raw["lnf_b"])


def qim_reference_packed(track_queries, packed):
    """Kernel-equivalent math in plain jnp (same bf16 weights / casts)."""
    f32, bf16 = jnp.float32, jnp.bfloat16
    D, H = DIM_IN, HIDDEN
    embed = track_queries["embeds_2"].reshape(-1, D).astype(f32)
    feat = track_queries["embeds_2_b"].reshape(-1, D).astype(f32)
    wa, wb, vecs = packed["wa"], packed["wb"], packed["vecs"]
    b_attn, b2, bf2 = vecs[0:1], vecs[2:3], vecs[4:5]
    b1, bf1 = vecs[1:2, :H], vecs[3:4, :H]
    g1, be1, g2, be2, gf, bef = (vecs[5:6], vecs[6:7], vecs[7:8],
                                 vecs[8:9], vecs[9:10], vecs[10:11])
    w_attn, w1, wf1 = wa[:, :D], wa[:, D:D + H], wa[:, D + H:]
    w2, wf2 = wb[:, :D], wb[:, D:]

    dot = lambda a, b: jnp.dot(a.astype(bf16), b, preferred_element_type=f32)
    tgt2 = dot(embed[0:1], w_attn) + b_attn
    tgt = _ln_ref(embed + tgt2, g1, be1)
    h = jnp.maximum(dot(tgt, w1) + b1, 0.0)
    tgt = _ln_ref(tgt + dot(h, w2) + b2, g2, be2)
    hf = jnp.maximum(dot(tgt, wf1) + bf1, 0.0)
    qf2 = dot(hf, wf2) + bf2
    return _ln_ref(feat + qf2, gf, bef)


# ------------------------------------ main -------------------------------------
if __name__ == "__main__":
    key = jax.random.PRNGKey(0)
    k_box, k_emb, k_feat, k_par = jax.random.split(key, 4)
    N = NUM_QUERIES

    pred_boxes_2 = jax.random.uniform(k_box, (1, N, 4), jnp.float32, 0.05, 0.95)
    embeds_2 = 0.5 * jax.random.normal(k_emb, (1, N, DIM_IN), jnp.float32)
    embeds_2_b = 0.5 * jax.random.normal(k_feat, (1, N, DIM_IN), jnp.float32)

    raw = init_params(k_par)
    packed = pack_params(raw)

    track_queries = {
        "pred_boxes_2": pred_boxes_2,   # kept for API fidelity; provably unused
        "embeds_2": embeds_2,
        "embeds_2_b": embeds_2_b,
    }

    out_tq = qim_forward(track_queries, packed)
    out = jax.block_until_ready(out_tq["embeds_2"])
    assert out.shape == (1, N, DIM_IN)

    # (a) tight check: kernel vs identical packed/bf16 math in plain jnp.
    ref_packed = qim_reference_packed(track_queries, packed).reshape(1, N, DIM_IN)
    if not jnp.allclose(out, ref_packed, atol=2e-3, rtol=2e-3):
        raise AssertionError("Pallas kernel does not match packed-jnp reference")

    # (b) semantic check: kernel vs original-module f32 math (tolerance covers
    #     the bf16 weight/activation quantization and the offline wv@wo fold).
    ref_f32 = qim_reference_f32(track_queries, raw)
    if not jnp.allclose(out, ref_f32, atol=5e-2, rtol=5e-2):
        raise AssertionError("Pallas kernel deviates from f32 module reference")

    print("KERNEL_OK")
</pallas_src>

<mosaic_0001>
module attributes {stable_mosaic.version = 11 : i64} {
  func.func @qim_kernel(%arg0: memref<8x256xf32, #tpu.memory_space<vmem>>, %arg1: memref<8x256xf32, #tpu.memory_space<vmem>>, %arg2: memref<256x512xbf16, #tpu.memory_space<vmem>>, %arg3: memref<128x512xbf16, #tpu.memory_space<vmem>>, %arg4: memref<16x256xf32, #tpu.memory_space<vmem>>, %arg5: memref<8x256xf32, #tpu.memory_space<vmem>>) attributes {dimension_semantics = [], scalar_prefetch = 0 : i64, scratch_operands = 0 : i64, tpu.core_type = #tpu.core_type<tc>} {
    %c0 = arith.constant 0 : index
    %c0_0 = arith.constant 0 : index
    %0 = vector.load %arg0[%c0, %c0_0] : memref<8x256xf32, #tpu.memory_space<vmem>>, vector<8x256xf32>
    %c0_1 = arith.constant 0 : index
    %c0_2 = arith.constant 0 : index
    %1 = vector.load %arg4[%c0_1, %c0_2] : memref<16x256xf32, #tpu.memory_space<vmem>>, vector<1x256xf32>
    %c1 = arith.constant 1 : index
    %c0_3 = arith.constant 0 : index
    %2 = vector.load %arg4[%c1, %c0_3] : memref<16x256xf32, #tpu.memory_space<vmem>>, vector<1x128xf32>
    %c2 = arith.constant 2 : index
    %c0_4 = arith.constant 0 : index
    %3 = vector.load %arg4[%c2, %c0_4] : memref<16x256xf32, #tpu.memory_space<vmem>>, vector<1x256xf32>
    %c3 = arith.constant 3 : index
    %c0_5 = arith.constant 0 : index
    %4 = vector.load %arg4[%c3, %c0_5] : memref<16x256xf32, #tpu.memory_space<vmem>>, vector<1x128xf32>
    %c4 = arith.constant 4 : index
    %c0_6 = arith.constant 0 : index
    %5 = vector.load %arg4[%c4, %c0_6] : memref<16x256xf32, #tpu.memory_space<vmem>>, vector<1x256xf32>
    %c5 = arith.constant 5 : index
    %c0_7 = arith.constant 0 : index
    %6 = vector.load %arg4[%c5, %c0_7] : memref<16x256xf32, #tpu.memory_space<vmem>>, vector<1x256xf32>
    %c6 = arith.constant 6 : index
    %c0_8 = arith.constant 0 : index
    %7 = vector.load %arg4[%c6, %c0_8] : memref<16x256xf32, #tpu.memory_space<vmem>>, vector<1x256xf32>
    %c7 = arith.constant 7 : index
    %c0_9 = arith.constant 0 : index
    %8 = vector.load %arg4[%c7, %c0_9] : memref<16x256xf32, #tpu.memory_space<vmem>>, vector<1x256xf32>
    %c8 = arith.constant 8 : index
    %c0_10 = arith.constant 0 : index
    %9 = vector.load %arg4[%c8, %c0_10] : memref<16x256xf32, #tpu.memory_space<vmem>>, vector<1x256xf32>
    %c9 = arith.constant 9 : index
    %c0_11 = arith.constant 0 : index
    %10 = vector.load %arg4[%c9, %c0_11] : memref<16x256xf32, #tpu.memory_space<vmem>>, vector<1x256xf32>
    %c10 = arith.constant 10 : index
    %c0_12 = arith.constant 0 : index
    %11 = vector.load %arg4[%c10, %c0_12] : memref<16x256xf32, #tpu.memory_space<vmem>>, vector<1x256xf32>
    %c0_13 = arith.constant 0 : index
    %c0_14 = arith.constant 0 : index
    %12 = vector.load %arg2[%c0_13, %c0_14] : memref<256x512xbf16, #tpu.memory_space<vmem>>, vector<256x256xbf16>
    %c0_15 = arith.constant 0 : index
    %c256 = arith.constant 256 : index
    %13 = vector.load %arg2[%c0_15, %c256] : memref<256x512xbf16, #tpu.memory_space<vmem>>, vector<256x128xbf16>
    %c0_16 = arith.constant 0 : index
    %c384 = arith.constant 384 : index
    %14 = vector.load %arg2[%c0_16, %c384] : memref<256x512xbf16, #tpu.memory_space<vmem>>, vector<256x128xbf16>
    %c0_17 = arith.constant 0 : index
    %c0_18 = arith.constant 0 : index
    %15 = vector.load %arg3[%c0_17, %c0_18] : memref<128x512xbf16, #tpu.memory_space<vmem>>, vector<128x256xbf16>
    %c0_19 = arith.constant 0 : index
    %c256_20 = arith.constant 256 : index
    %16 = vector.load %arg3[%c0_19, %c256_20] : memref<128x512xbf16, #tpu.memory_space<vmem>>, vector<128x256xbf16>
    %17 = vector.extract_strided_slice %0 {offsets = [0, 0], sizes = [1, 256], strides = [1, 1]} : vector<8x256xf32> to vector<1x256xf32>
    %18 = arith.truncf %17 : vector<1x256xf32> to vector<1x256xbf16>
    %cst = arith.constant dense<0.000000e+00> : vector<1x256xf32>
    %19 = tpu.matmul %18, %12, %cst {dimension_numbers = #tpu.dot_dimension_numbers<[1], [0], [0], [1], [0, 0, 1, 1], [], []>} : vector<1x256xbf16>, vector<256x256xbf16>, vector<1x256xf32> -> vector<1x256xf32>
    %20 = arith.addf %19, %1 : vector<1x256xf32>
    %21 = vector.broadcast %20 : vector<1x256xf32> to vector<8x256xf32>
    %22 = arith.addf %0, %21 : vector<8x256xf32>
    %cst_21 = arith.constant dense<0.000000e+00> : vector<8xf32>
    %23 = vector.multi_reduction <add>, %22, %cst_21 [1] : vector<8x256xf32> to vector<8xf32>
    %24 = vector.shape_cast %23 : vector<8xf32> to vector<8x1xf32>
    %cst_22 = arith.constant 2.560000e+02 : f32
    %25 = vector.broadcast %cst_22 : f32 to vector<8x1xf32>
    %26 = arith.divf %24, %25 : vector<8x1xf32>
    %27 = vector.broadcast %26 : vector<8x1xf32> to vector<8x256xf32>
    %28 = arith.subf %22, %27 : vector<8x256xf32>
    %29 = arith.mulf %28, %28 : vector<8x256xf32>
    %cst_23 = arith.constant dense<0.000000e+00> : vector<8xf32>
    %30 = vector.multi_reduction <add>, %29, %cst_23 [1] : vector<8x256xf32> to vector<8xf32>
    %31 = vector.shape_cast %30 : vector<8xf32> to vector<8x1xf32>
    %cst_24 = arith.constant 2.560000e+02 : f32
    %32 = vector.broadcast %cst_24 : f32 to vector<8x1xf32>
    %33 = arith.divf %31, %32 : vector<8x1xf32>
    %cst_25 = arith.constant 9.99999974E-6 : f32
    %34 = vector.broadcast %cst_25 : f32 to vector<8x1xf32>
    %35 = arith.addf %33, %34 : vector<8x1xf32>
    %36 = math.rsqrt %35 : vector<8x1xf32>
    %37 = vector.broadcast %36 : vector<8x1xf32> to vector<8x256xf32>
    %38 = arith.mulf %28, %37 : vector<8x256xf32>
    %39 = vector.broadcast %6 : vector<1x256xf32> to vector<8x256xf32>
    %40 = arith.mulf %38, %39 : vector<8x256xf32>
    %41 = vector.broadcast %7 : vector<1x256xf32> to vector<8x256xf32>
    %42 = arith.addf %40, %41 : vector<8x256xf32>
    %43 = arith.truncf %42 : vector<8x256xf32> to vector<8x256xbf16>
    %cst_26 = arith.constant dense<0.000000e+00> : vector<8x128xf32>
    %44 = tpu.matmul %43, %13, %cst_26 {dimension_numbers = #tpu.dot_dimension_numbers<[1], [0], [0], [1], [0, 0, 1, 1], [], []>} : vector<8x256xbf16>, vector<256x128xbf16>, vector<8x128xf32> -> vector<8x128xf32>
    %45 = vector.broadcast %2 : vector<1x128xf32> to vector<8x128xf32>
    %46 = arith.addf %44, %45 : vector<8x128xf32>
    %cst_27 = arith.constant 0.000000e+00 : f32
    %47 = vector.broadcast %cst_27 : f32 to vector<8x128xf32>
    %48 = arith.maximumf %46, %47 : vector<8x128xf32>
    %49 = arith.truncf %48 : vector<8x128xf32> to vector<8x128xbf16>
    %cst_28 = arith.constant dense<0.000000e+00> : vector<8x256xf32>
    %50 = tpu.matmul %49, %15, %cst_28 {dimension_numbers = #tpu.dot_dimension_numbers<[1], [0], [0], [1], [0, 0, 1, 1], [], []>} : vector<8x128xbf16>, vector<128x256xbf16>, vector<8x256xf32> -> vector<8x256xf32>
    %51 = vector.broadcast %3 : vector<1x256xf32> to vector<8x256xf32>
    %52 = arith.addf %50, %51 : vector<8x256xf32>
    %53 = arith.addf %42, %52 : vector<8x256xf32>
    %cst_29 = arith.constant dense<0.000000e+00> : vector<8xf32>
    %54 = vector.multi_reduction <add>, %53, %cst_29 [1] : vector<8x256xf32> to vector<8xf32>
    %55 = vector.shape_cast %54 : vector<8xf32> to vector<8x1xf32>
    %cst_30 = arith.constant 2.560000e+02 : f32
    %56 = vector.broadcast %cst_30 : f32 to vector<8x1xf32>
    %57 = arith.divf %55, %56 : vector<8x1xf32>
    %58 = vector.broadcast %57 : vector<8x1xf32> to vector<8x256xf32>
    %59 = arith.subf %53, %58 : vector<8x256xf32>
    %60 = arith.mulf %59, %59 : vector<8x256xf32>
    %cst_31 = arith.constant dense<0.000000e+00> : vector<8xf32>
    %61 = vector.multi_reduction <add>, %60, %cst_31 [1] : vector<8x256xf32> to vector<8xf32>
    %62 = vector.shape_cast %61 : vector<8xf32> to vector<8x1xf32>
    %cst_32 = arith.constant 2.560000e+02 : f32
    %63 = vector.broadcast %cst_32 : f32 to vector<8x1xf32>
    %64 = arith.divf %62, %63 : vector<8x1xf32>
    %cst_33 = arith.constant 9.99999974E-6 : f32
    %65 = vector.broadcast %cst_33 : f32 to vector<8x1xf32>
    %66 = arith.addf %64, %65 : vector<8x1xf32>
    %67 = math.rsqrt %66 : vector<8x1xf32>
    %68 = vector.broadcast %67 : vector<8x1xf32> to vector<8x256xf32>
    %69 = arith.mulf %59, %68 : vector<8x256xf32>
    %70 = vector.broadcast %8 : vector<1x256xf32> to vector<8x256xf32>
    %71 = arith.mulf %69, %70 : vector<8x256xf32>
    %72 = vector.broadcast %9 : vector<1x256xf32> to vector<8x256xf32>
    %73 = arith.addf %71, %72 : vector<8x256xf32>
    %74 = arith.truncf %73 : vector<8x256xf32> to vector<8x256xbf16>
    %cst_34 = arith.constant dense<0.000000e+00> : vector<8x128xf32>
    %75 = tpu.matmul %74, %14, %cst_34 {dimension_numbers = #tpu.dot_dimension_numbers<[1], [0], [0], [1], [0, 0, 1, 1], [], []>} : vector<8x256xbf16>, vector<256x128xbf16>, vector<8x128xf32> -> vector<8x128xf32>
    %76 = vector.broadcast %4 : vector<1x128xf32> to vector<8x128xf32>
    %77 = arith.addf %75, %76 : vector<8x128xf32>
    %cst_35 = arith.constant 0.000000e+00 : f32
    %78 = vector.broadcast %cst_35 : f32 to vector<8x128xf32>
    %79 = arith.maximumf %77, %78 : vector<8x128xf32>
    %80 = arith.truncf %79 : vector<8x128xf32> to vector<8x128xbf16>
    %cst_36 = arith.constant dense<0.000000e+00> : vector<8x256xf32>
    %81 = tpu.matmul %80, %16, %cst_36 {dimension_numbers = #tpu.dot_dimension_numbers<[1], [0], [0], [1], [0, 0, 1, 1], [], []>} : vector<8x128xbf16>, vector<128x256xbf16>, vector<8x256xf32> -> vector<8x256xf32>
    %82 = vector.broadcast %5 : vector<1x256xf32> to vector<8x256xf32>
    %83 = arith.addf %81, %82 : vector<8x256xf32>
    %c0_37 = arith.constant 0 : index
    %c0_38 = arith.constant 0 : index
    %84 = vector.load %arg1[%c0_37, %c0_38] : memref<8x256xf32, #tpu.memory_space<vmem>>, vector<8x256xf32>
    %85 = arith.addf %84, %83 : vector<8x256xf32>
    %cst_39 = arith.constant dense<0.000000e+00> : vector<8xf32>
    %86 = vector.multi_reduction <add>, %85, %cst_39 [1] : vector<8x256xf32> to vector<8xf32>
    %87 = vector.shape_cast %86 : vector<8xf32> to vector<8x1xf32>
    %cst_40 = arith.constant 2.560000e+02 : f32
    %88 = vector.broadcast %cst_40 : f32 to vector<8x1xf32>
    %89 = arith.divf %87, %88 : vector<8x1xf32>
    %90 = vector.broadcast %89 : vector<8x1xf32> to vector<8x256xf32>
    %91 = arith.subf %85, %90 : vector<8x256xf32>
    %92 = arith.mulf %91, %91 : vector<8x256xf32>
    %cst_41 = arith.constant dense<0.000000e+00> : vector<8xf32>
    %93 = vector.multi_reduction <add>, %92, %cst_41 [1] : vector<8x256xf32> to vector<8xf32>
    %94 = vector.shape_cast %93 : vector<8xf32> to vector<8x1xf32>
    %cst_42 = arith.constant 2.560000e+02 : f32
    %95 = vector.broadcast %cst_42 : f32 to vector<8x1xf32>
    %96 = arith.divf %94, %95 : vector<8x1xf32>
    %cst_43 = arith.constant 9.99999974E-6 : f32
    %97 = vector.broadcast %cst_43 : f32 to vector<8x1xf32>
    %98 = arith.addf %96, %97 : vector<8x1xf32>
    %99 = math.rsqrt %98 : vector<8x1xf32>
    %100 = vector.broadcast %99 : vector<8x1xf32> to vector<8x256xf32>
    %101 = arith.mulf %91, %100 : vector<8x256xf32>
    %102 = vector.broadcast %10 : vector<1x256xf32> to vector<8x256xf32>
    %103 = arith.mulf %101, %102 : vector<8x256xf32>
    %104 = vector.broadcast %11 : vector<1x256xf32> to vector<8x256xf32>
    %105 = arith.addf %103, %104 : vector<8x256xf32>
    %c0_44 = arith.constant 0 : index
    %c0_45 = arith.constant 0 : index
    %106 = vector.load %arg5[%c0_44, %c0_45] : memref<8x256xf32, #tpu.memory_space<vmem>>, vector<8x256xf32>
    tpu.vector_store %arg5[%c0_44, %c0_45], %105 {strides = array<i32>} : memref<8x256xf32, #tpu.memory_space<vmem>>, vector<8x256xf32>,
    return
  }
}

</mosaic_0001>

<llo_original>
// kernel: tpu_custom_call.1
$region0: #{tpu_custom_call.1}
  #allocation0 [shape = 'u32[]', space=smem, size = 0x4, offset = 0x4, fixed_abs, tag = 'smem constant byte address 0x4 - core index']
  #allocation1 [shape = 'u32[144,128]{1,0:T(1,128)}', space=vmem, size = 0x12000, scoped, tag = 'internal scratch']
  %s0 = inlined_call_operand.hbm [shape: f32[8,256], index: 0, kind: input, shape index: {}]
  %s1 = inlined_call_operand.hbm [shape: f32[8,256], index: 1, kind: input, shape index: {}]
  %s2 = inlined_call_operand.hbm [shape: bf16[256,512], index: 2, kind: input, shape index: {}]
  %s3 = inlined_call_operand.hbm [shape: bf16[128,512], index: 3, kind: input, shape index: {}]
  %s4 = inlined_call_operand.hbm [shape: f32[16,256], index: 4, kind: input, shape index: {}]
  %s5 = inlined_call_operand.hbm [shape: f32[8,256], index: 5, kind: output, shape index: {}]
  %s6 = sld [smem:[#allocation0]]
  $region50: #{tpu_custom_call.1} parent=0
    _
  %s8 = ssub.s32 1, %s6
  %s9 = scalar_select 0, %s8, %s6
  $region1: #{tpu_custom_call.1} parent=0
    #allocation2 [shape = 'u8[8192]{0}', space=vmem, size = 0x2000, scoped, tag = 'input window, operand 0, single buffered']
    #allocation3 [shape = 's32[1]{0}', space=sflag, size = 0x4, scoped, tag = 'scoped memory for tpu_custom_call.1']
    #allocation4 [shape = 's32[1]{0}', space=sflag, size = 0x4, scoped, tag = 'scoped memory for tpu_custom_call.1']
    #allocation5 [shape = 'u8[8192]{0}', space=vmem, size = 0x2000, scoped, tag = 'input window, operand 1, single buffered']
    #allocation6 [shape = 's32[1]{0}', space=sflag, size = 0x4, scoped, tag = 'scoped memory for tpu_custom_call.1']
    #allocation7 [shape = 'u8[262144]{0}', space=vmem, size = 0x40000, scoped, tag = 'input window, operand 2, single buffered']
    #allocation8 [shape = 'u8[131072]{0}', space=vmem, size = 0x20000, scoped, tag = 'input window, operand 3, single buffered']
    #allocation9 [shape = 's32[1]{0}', space=sflag, size = 0x4, scoped, tag = 'scoped memory for tpu_custom_call.1']
    #allocation10 [shape = 'u8[16384]{0}', space=vmem, size = 0x4000, scoped, tag = 'input window, operand 4, single buffered']
    #allocation11 [shape = 'u8[8192]{0}', space=vmem, size = 0x2000, scoped, tag = 'output window, operand 0, single buffered']
    %10 = vsyncpa [#allocation3], 0
    %11 = vsyncpa [#allocation6], 0
    %12 = vsyncpa [#allocation9], 0
    %13 = vsyncpa [#allocation4], 0
    // Predicated region
    $region2: #{tpu_custom_call.1} parent=1 // pred_check
      _
    $region3: #{tpu_custom_call.1} parent=1 // pred_check_branch
      %15 = sbr.rel (0) target = $region5
    $region4: #{tpu_custom_call.1} parent=1 // pred_region
      %s17 = ssub.s32 256, 256
      %18 = vsyncadd [#allocation3], %s17
      %s20 = sshll.u32 [#allocation2], 4
      %s21 = int_to_ptr.vmem [resolvable:$true] %s20
      %23 = dma.hbm_to_vmem [thread:$0]  %s0, 256, %s21, [#allocation3]
    $region5: #{tpu_custom_call.1} parent=1 // pred_fallthru
      _
    // Predicated region
    $region6: #{tpu_custom_call.1} parent=1 // pred_check
      _
    $region7: #{tpu_custom_call.1} parent=1 // pred_check_branch
      %25 = sbr.rel (0) target = $region9
    $region8: #{tpu_custom_call.1} parent=1 // pred_region
      %s27 = ssub.s32 256, 256
      %28 = vsyncadd [#allocation6], %s27
      %s30 = sshll.u32 [#allocation5], 4
      %s31 = int_to_ptr.vmem [resolvable:$true] %s30
      %33 = dma.hbm_to_vmem [thread:$0]  %s1, 256, %s31, [#allocation6]
    $region9: #{tpu_custom_call.1} parent=1 // pred_fallthru
      _
    // Predicated region
    $region10: #{tpu_custom_call.1} parent=1 // pred_check
      _
    $region11: #{tpu_custom_call.1} parent=1 // pred_check_branch
      %35 = sbr.rel (0) target = $region13
    $region12: #{tpu_custom_call.1} parent=1 // pred_region
      %s37 = ssub.s32 8192, 8192
      %38 = vsyncadd [#allocation6], %s37
      %s39 = sshll.u32 [#allocation7], 4
      %s40 = int_to_ptr.vmem [resolvable:$true] %s39
      %45 = dma.hbm_to_vmem [thread:$0]  %s2, 8192, %s40, [#allocation6], 256, 256, 16
    $region13: #{tpu_custom_call.1} parent=1 // pred_fallthru
      _
    // Predicated region
    $region14: #{tpu_custom_call.1} parent=1 // pred_check
      _
    $region15: #{tpu_custom_call.1} parent=1 // pred_check_branch
      %47 = sbr.rel (0) target = $region17
    $region16: #{tpu_custom_call.1} parent=1 // pred_region
      %s49 = ssub.s32 4096, 4096
      %50 = vsyncadd [#allocation9], %s49
      %s51 = sshll.u32 [#allocation8], 4
      %s52 = int_to_ptr.vmem [resolvable:$true] %s51
      %57 = dma.hbm_to_vmem [thread:$0]  %s3, 4096, %s52, [#allocation9], 256, 256, 16
    $region17: #{tpu_custom_call.1} parent=1 // pred_fallthru
      _
    // Predicated region
    $region18: #{tpu_custom_call.1} parent=1 // pred_check
      _
    $region19: #{tpu_custom_call.1} parent=1 // pred_check_branch
      %59 = sbr.rel (0) target = $region21
    $region20: #{tpu_custom_call.1} parent=1 // pred_region
      %s61 = ssub.s32 512, 512
      %62 = vsyncadd [#allocation9], %s61
      %s63 = sshll.u32 [#allocation10], 4
      %s64 = int_to_ptr.vmem [resolvable:$true] %s63
      %69 = dma.hbm_to_vmem [thread:$0]  %s4, 512, %s64, [#allocation9], 256, 256, 16
    $region21: #{tpu_custom_call.1} parent=1 // pred_fallthru
      _
    // Predicated region
    $region22: #{tpu_custom_call.1} parent=1 // pred_check
      _
    $region23: #{tpu_custom_call.1} parent=1 // pred_check_branch
      %71 = sbr.rel (0) target = $region25
    $region24: #{tpu_custom_call.1} parent=1 // pred_region
      %72 = dma.done [#allocation3], 256
    $region25: #{tpu_custom_call.1} parent=1 // pred_fallthru
      _
    // Predicated region
    $region26: #{tpu_custom_call.1} parent=1 // pred_check
      _
    $region27: #{tpu_custom_call.1} parent=1 // pred_check_branch
      %74 = sbr.rel (0) target = $region29
    $region28: #{tpu_custom_call.1} parent=1 // pred_region
      %75 = dma.done [#allocation6], 256
    $region29: #{tpu_custom_call.1} parent=1 // pred_fallthru
      _
    // Predicated region
    $region30: #{tpu_custom_call.1} parent=1 // pred_check
      _
    $region31: #{tpu_custom_call.1} parent=1 // pred_check_branch
      %77 = sbr.rel (0) target = $region33
    $region32: #{tpu_custom_call.1} parent=1 // pred_region
      %78 = dma.done [#allocation6], 8192
    $region33: #{tpu_custom_call.1} parent=1 // pred_fallthru
      _
    // Predicated region
    $region34: #{tpu_custom_call.1} parent=1 // pred_check
      _
    $region35: #{tpu_custom_call.1} parent=1 // pred_check_branch
      %80 = sbr.rel (0) target = $region37
    $region36: #{tpu_custom_call.1} parent=1 // pred_region
      %81 = dma.done [#allocation9], 4096
    $region37: #{tpu_custom_call.1} parent=1 // pred_fallthru
      _
    // Predicated region
    $region38: #{tpu_custom_call.1} parent=1 // pred_check
      _
    $region39: #{tpu_custom_call.1} parent=1 // pred_check_branch
      %83 = sbr.rel (0) target = $region41
    $region40: #{tpu_custom_call.1} parent=1 // pred_region
      %84 = dma.done [#allocation9], 512
    $region41: #{tpu_custom_call.1} parent=1 // pred_fallthru
      _
    %v86 = vld [vmem:[#allocation2] sm:$0xff]
    %v87 = vld [vmem:[#allocation2 + $0x8] sm:$0xff]
    %v88 = vld [vmem:[#allocation10] ss:$8 sm:$0x3]
    %v89 = vld [vmem:[#allocation10 + $0x1] ss:$0 sm:$0xff]
    %s90 = scalar_lea.vmem [#allocation10], 2
    %v91 = vld [vmem:[%s90] ss:$8 sm:$0x3]
    %v92 = vld [vmem:[#allocation10 + $0x3] ss:$0 sm:$0xff]
    %s93 = scalar_lea.vmem [#allocation10], 4
    %v94 = vld [vmem:[%s93] ss:$8 sm:$0x3]
    %s95 = scalar_lea.vmem [#allocation10], 5
    %v96 = vld [vmem:[%s95] ss:$8 sm:$0x3]
    %s97 = scalar_lea.vmem [#allocation10], 6
    %v98 = vld [vmem:[%s97] ss:$8 sm:$0x3]
    %s99 = scalar_lea.vmem [#allocation10], 7
    %v100 = vld [vmem:[%s99] ss:$8 sm:$0x3]
    %s101 = scalar_lea.vmem [#allocation10], 16
    %v102 = vld [vmem:[%s101] ss:$8 sm:$0x3]
    %s103 = scalar_lea.vmem [#allocation10], 17
    %v104 = vld [vmem:[%s103] ss:$8 sm:$0x3]
    %s105 = scalar_lea.vmem [#allocation10], 18
    %v106 = vld [vmem:[%s105] ss:$8 sm:$0x3]
    %v107 = vld [vmem:[#allocation7] sm:$0xff]
    %v108 = vld [vmem:[#allocation7 + $0x10] sm:$0xff]
    %v109 = vld [vmem:[#allocation7 + $0x20] sm:$0xff]
    %v110 = vld [vmem:[#allocation7 + $0x30] sm:$0xff]
    %v111 = vld [vmem:[#allocation7 + $0x40] sm:$0xff]
    %v112 = vld [vmem:[#allocation7 + $0x50] sm:$0xff]
    %v113 = vld [vmem:[#allocation7 + $0x60] sm:$0xff]
    %v114 = vld [vmem:[#allocation7 + $0x70] sm:$0xff]
    %v115 = vld [vmem:[#allocation7 + $0x80] sm:$0xff]
    %v116 = vld [vmem:[#allocation7 + $0x90] sm:$0xff]
    %v117 = vld [vmem:[#allocation7 + $0xa0] sm:$0xff]
    %v118 = vld [vmem:[#allocation7 + $0xb0] sm:$0xff]
    %v119 = vld [vmem:[#allocation7 + $0xc0] sm:$0xff]
    %v120 = vld [vmem:[#allocation7 + $0xd0] sm:$0xff]
    %v121 = vld [vmem:[#allocation7 + $0xe0] sm:$0xff]
    %v122 = vld [vmem:[#allocation7 + $0xf0] sm:$0xff]
    %v123 = vld [vmem:[#allocation7 + $0x100] sm:$0xff]
    %v124 = vld [vmem:[#allocation7 + $0x110] sm:$0xff]
    %v125 = vld [vmem:[#allocation7 + $0x120] sm:$0xff]
    %v126 = vld [vmem:[#allocation7 + $0x130] sm:$0xff]
    %v127 = vld [vmem:[#allocation7 + $0x140] sm:$0xff]
    %v128 = vld [vmem:[#allocation7 + $0x150] sm:$0xff]
    %v129 = vld [vmem:[#allocation7 + $0x160] sm:$0xff]
    %v130 = vld [vmem:[#allocation7 + $0x170] sm:$0xff]
    %v131 = vld [vmem:[#allocation7 + $0x180] sm:$0xff]
    %v132 = vld [vmem:[#allocation7 + $0x190] sm:$0xff]
    %v133 = vld [vmem:[#allocation7 + $0x1a0] sm:$0xff]
    %v134 = vld [vmem:[#allocation7 + $0x1b0] sm:$0xff]
    %v135 = vld [vmem:[#allocation7 + $0x1c0] sm:$0xff]
    %v136 = vld [vmem:[#allocation7 + $0x1d0] sm:$0xff]
    %v137 = vld [vmem:[#allocation7 + $0x1e0] sm:$0xff]
    %v138 = vld [vmem:[#allocation7 + $0x1f0] sm:$0xff]
    %v139 = vld [vmem:[#allocation7 + $0x8] sm:$0xf]
    %v140 = vld [vmem:[#allocation7 + $0x18] sm:$0xf]
    %v141 = vld [vmem:[#allocation7 + $0x28] sm:$0xf]
    %v142 = vld [vmem:[#allocation7 + $0x38] sm:$0xf]
    %v143 = vld [vmem:[#allocation7 + $0x48] sm:$0xf]
    %v144 = vld [vmem:[#allocation7 + $0x58] sm:$0xf]
    %v145 = vld [vmem:[#allocation7 + $0x68] sm:$0xf]
    %v146 = vld [vmem:[#allocation7 + $0x78] sm:$0xf]
    %v147 = vld [vmem:[#allocation7 + $0x88] sm:$0xf]
    %v148 = vld [vmem:[#allocation7 + $0x98] sm:$0xf]
    %v149 = vld [vmem:[#allocation7 + $0xa8] sm:$0xf]
    %v150 = vld [vmem:[#allocation7 + $0xb8] sm:$0xf]
    %v151 = vld [vmem:[#allocation7 + $0xc8] sm:$0xf]
    %v152 = vld [vmem:[#allocation7 + $0xd8] sm:$0xf]
    %v153 = vld [vmem:[#allocation7 + $0xe8] sm:$0xf]
    %v154 = vld [vmem:[#allocation7 + $0xf8] sm:$0xf]
    %v155 = vld [vmem:[#allocation7 + $0x108] sm:$0xf]
    %v156 = vld [vmem:[#allocation7 + $0x118] sm:$0xf]
    %v157 = vld [vmem:[#allocation7 + $0x128] sm:$0xf]
    %v158 = vld [vmem:[#allocation7 + $0x138] sm:$0xf]
    %v159 = vld [vmem:[#allocation7 + $0x148] sm:$0xf]
    %v160 = vld [vmem:[#allocation7 + $0x158] sm:$0xf]
    %v161 = vld [vmem:[#allocation7 + $0x168] sm:$0xf]
    %v162 = vld [vmem:[#allocation7 + $0x178] sm:$0xf]
    %v163 = vld [vmem:[#allocation7 + $0x188] sm:$0xf]
    %v164 = vld [vmem:[#allocation7 + $0x198] sm:$0xf]
    %v165 = vld [vmem:[#allocation7 + $0x1a8] sm:$0xf]
    %v166 = vld [vmem:[#allocation7 + $0x1b8] sm:$0xf]
    %v167 = vld [vmem:[#allocation7 + $0x1c8] sm:$0xf]
    %v168 = vld [vmem:[#allocation7 + $0x1d8] sm:$0xf]
    %v169 = vld [vmem:[#allocation7 + $0x1e8] sm:$0xf]
    %v170 = vld [vmem:[#allocation7 + $0x1f8] sm:$0xf]
    %v171 = vld [vmem:[#allocation7 + $0xc] sm:$0xf]
    %v172 = vld [vmem:[#allocation7 + $0x1c] sm:$0xf]
    %v173 = vld [vmem:[#allocation7 + $0x2c] sm:$0xf]
    %v174 = vld [vmem:[#allocation7 + $0x3c] sm:$0xf]
    %v175 = vld [vmem:[#allocation7 + $0x4c] sm:$0xf]
    %v176 = vld [vmem:[#allocation7 + $0x5c] sm:$0xf]
    %v177 = vld [vmem:[#allocation7 + $0x6c] sm:$0xf]
    %v178 = vld [vmem:[#allocation7 + $0x7c] sm:$0xf]
    %v179 = vld [vmem:[#allocation7 + $0x8c] sm:$0xf]
    %v180 = vld [vmem:[#allocation7 + $0x9c] sm:$0xf]
    %v181 = vld [vmem:[#allocation7 + $0xac] sm:$0xf]
    %v182 = vld [vmem:[#allocation7 + $0xbc] sm:$0xf]
    %v183 = vld [vmem:[#allocation7 + $0xcc] sm:$0xf]
    %v184 = vld [vmem:[#allocation7 + $0xdc] sm:$0xf]
    %v185 = vld [vmem:[#allocation7 + $0xec] sm:$0xf]
    %v186 = vld [vmem:[#allocation7 + $0xfc] sm:$0xf]
    %v187 = vld [vmem:[#allocation7 + $0x10c] sm:$0xf]
    %v188 = vld [vmem:[#allocation7 + $0x11c] sm:$0xf]
    %v189 = vld [vmem:[#allocation7 + $0x12c] sm:$0xf]
    %v190 = vld [vmem:[#allocation7 + $0x13c] sm:$0xf]
    %v191 = vld [vmem:[#allocation7 + $0x14c] sm:$0xf]
    %v192 = vld [vmem:[#allocation7 + $0x15c] sm:$0xf]
    %v193 = vld [vmem:[#allocation7 + $0x16c] sm:$0xf]
    %v194 = vld [vmem:[#allocation7 + $0x17c] sm:$0xf]
    %v195 = vld [vmem:[#allocation7 + $0x18c] sm:$0xf]
    %v196 = vld [vmem:[#allocation7 + $0x19c] sm:$0xf]
    %v197 = vld [vmem:[#allocation7 + $0x1ac] sm:$0xf]
    %v198 = vld [vmem:[#allocation7 + $0x1bc] sm:$0xf]
    %v199 = vld [vmem:[#allocation7 + $0x1cc] sm:$0xf]
    %v200 = vld [vmem:[#allocation7 + $0x1dc] sm:$0xf]
    %v201 = vld [vmem:[#allocation7 + $0x1ec] sm:$0xf]
    %v202 = vld [vmem:[#allocation7 + $0x1fc] sm:$0xf]
    %v203 = vld [vmem:[#allocation8] sm:$0xff]
    %v204 = vld [vmem:[#allocation8 + $0x10] sm:$0xff]
    %v205 = vld [vmem:[#allocation8 + $0x20] sm:$0xff]
    %v206 = vld [vmem:[#allocation8 + $0x30] sm:$0xff]
    %v207 = vld [vmem:[#allocation8 + $0x40] sm:$0xff]
    %v208 = vld [vmem:[#allocation8 + $0x50] sm:$0xff]
    %v209 = vld [vmem:[#allocation8 + $0x60] sm:$0xff]
    %v210 = vld [vmem:[#allocation8 + $0x70] sm:$0xff]
    %v211 = vld [vmem:[#allocation8 + $0x80] sm:$0xff]
    %v212 = vld [vmem:[#allocation8 + $0x90] sm:$0xff]
    %v213 = vld [vmem:[#allocation8 + $0xa0] sm:$0xff]
    %v214 = vld [vmem:[#allocation8 + $0xb0] sm:$0xff]
    %v215 = vld [vmem:[#allocation8 + $0xc0] sm:$0xff]
    %v216 = vld [vmem:[#allocation8 + $0xd0] sm:$0xff]
    %v217 = vld [vmem:[#allocation8 + $0xe0] sm:$0xff]
    %v218 = vld [vmem:[#allocation8 + $0xf0] sm:$0xff]
    %v219 = vld [vmem:[#allocation8 + $0x8] sm:$0xff]
    %v220 = vld [vmem:[#allocation8 + $0x18] sm:$0xff]
    %v221 = vld [vmem:[#allocation8 + $0x28] sm:$0xff]
    %v222 = vld [vmem:[#allocation8 + $0x38] sm:$0xff]
    %v223 = vld [vmem:[#allocation8 + $0x48] sm:$0xff]
    %v224 = vld [vmem:[#allocation8 + $0x58] sm:$0xff]
    %v225 = vld [vmem:[#allocation8 + $0x68] sm:$0xff]
    %v226 = vld [vmem:[#allocation8 + $0x78] sm:$0xff]
    %v227 = vld [vmem:[#allocation8 + $0x88] sm:$0xff]
    %v228 = vld [vmem:[#allocation8 + $0x98] sm:$0xff]
    %v229 = vld [vmem:[#allocation8 + $0xa8] sm:$0xff]
    %v230 = vld [vmem:[#allocation8 + $0xb8] sm:$0xff]
    %v231 = vld [vmem:[#allocation8 + $0xc8] sm:$0xff]
    %v232 = vld [vmem:[#allocation8 + $0xd8] sm:$0xff]
    %v233 = vld [vmem:[#allocation8 + $0xe8] sm:$0xff]
    %v234 = vld [vmem:[#allocation8 + $0xf8] sm:$0xff]
    %v235 = vpack.c.bf16 %v86, %v86
    %v236 = vpack.c.bf16 %v87, %v87
    %v269 = vunpack.c.l.b16 %v107
    %v270 = vunpack.c.h.b16 %v107
    %v271 = vunpack.c.l.b16 %v108
    %v272 = vunpack.c.h.b16 %v108
    %v273 = vunpack.c.l.b16 %v109
    %v274 = vunpack.c.h.b16 %v109
    %v275 = vunpack.c.l.b16 %v110
    %v276 = vunpack.c.h.b16 %v110
    %v277 = vunpack.c.l.b16 %v111
    %v278 = vunpack.c.h.b16 %v111
    %v279 = vunpack.c.l.b16 %v112
    %v280 = vunpack.c.h.b16 %v112
    %v281 = vunpack.c.l.b16 %v113
    %v282 = vunpack.c.h.b16 %v113
    %v283 = vunpack.c.l.b16 %v114
    %v284 = vunpack.c.h.b16 %v114
    %v285 = vunpack.c.l.b16 %v115
    %v286 = vunpack.c.h.b16 %v115
    %v287 = vunpack.c.l.b16 %v116
    %v288 = vunpack.c.h.b16 %v116
    %v289 = vunpack.c.l.b16 %v117
    %v290 = vunpack.c.h.b16 %v117
    %v291 = vunpack.c.l.b16 %v118
    %v292 = vunpack.c.h.b16 %v118
    %v293 = vunpack.c.l.b16 %v119
    %v294 = vunpack.c.h.b16 %v119
    %v295 = vunpack.c.l.b16 %v120
    %v296 = vunpack.c.h.b16 %v120
    %v297 = vunpack.c.l.b16 %v121
    %v298 = vunpack.c.h.b16 %v121
    %v299 = vunpack.c.l.b16 %v122
    %v300 = vunpack.c.h.b16 %v122
    %v301 = vunpack.c.l.b16 %v123
    %v302 = vunpack.c.h.b16 %v123
    %v303 = vunpack.c.l.b16 %v124
    %v304 = vunpack.c.h.b16 %v124
    %v305 = vunpack.c.l.b16 %v125
    %v306 = vunpack.c.h.b16 %v125
    %v307 = vunpack.c.l.b16 %v126
    %v308 = vunpack.c.h.b16 %v126
    %v309 = vunpack.c.l.b16 %v127
    %v310 = vunpack.c.h.b16 %v127
    %v311 = vunpack.c.l.b16 %v128
    %v312 = vunpack.c.h.b16 %v128
    %v313 = vunpack.c.l.b16 %v129
    %v314 = vunpack.c.h.b16 %v129
    %v315 = vunpack.c.l.b16 %v130
    %v316 = vunpack.c.h.b16 %v130
    %v317 = vunpack.c.l.b16 %v131
    %v318 = vunpack.c.h.b16 %v131
    %v319 = vunpack.c.l.b16 %v132
    %v320 = vunpack.c.h.b16 %v132
    %v321 = vunpack.c.l.b16 %v133
    %v322 = vunpack.c.h.b16 %v133
    %v323 = vunpack.c.l.b16 %v134
    %v324 = vunpack.c.h.b16 %v134
    %v325 = vunpack.c.l.b16 %v135
    %v326 = vunpack.c.h.b16 %v135
    %v327 = vunpack.c.l.b16 %v136
    %v328 = vunpack.c.h.b16 %v136
    %v329 = vunpack.c.l.b16 %v137
    %v330 = vunpack.c.h.b16 %v137
    %v331 = vunpack.c.l.b16 %v138
    %v332 = vunpack.c.h.b16 %v138
    %v333 = vpack.c.b16 %v271, %v269
    %v334 = vpack.c.b16 %v272, %v270
    %v335 = vpack.c.b16 %v275, %v273
    %v336 = vpack.c.b16 %v276, %v274
    %v337 = vpack.c.b16 %v279, %v277
    %v338 = vpack.c.b16 %v280, %v278
    %v339 = vpack.c.b16 %v283, %v281
    %v340 = vpack.c.b16 %v284, %v282
    %v341 = vpack.c.b16 %v287, %v285
    %v342 = vpack.c.b16 %v288, %v286
    %v343 = vpack.c.b16 %v291, %v289
    %v344 = vpack.c.b16 %v292, %v290
    %v345 = vpack.c.b16 %v295, %v293
    %v346 = vpack.c.b16 %v296, %v294
    %v347 = vpack.c.b16 %v299, %v297
    %v348 = vpack.c.b16 %v300, %v298
    %v349 = vpack.c.b16 %v303, %v301
    %v350 = vpack.c.b16 %v304, %v302
    %v351 = vpack.c.b16 %v307, %v305
    %v352 = vpack.c.b16 %v308, %v306
    %v353 = vpack.c.b16 %v311, %v309
    %v354 = vpack.c.b16 %v312, %v310
    %v355 = vpack.c.b16 %v315, %v313
    %v356 = vpack.c.b16 %v316, %v314
    %v357 = vpack.c.b16 %v319, %v317
    %v358 = vpack.c.b16 %v320, %v318
    %v359 = vpack.c.b16 %v323, %v321
    %v360 = vpack.c.b16 %v324, %v322
    %v361 = vpack.c.b16 %v327, %v325
    %v362 = vpack.c.b16 %v328, %v326
    %v363 = vpack.c.b16 %v331, %v329
    %v364 = vpack.c.b16 %v332, %v330
    %v398 = vlaneseq
    %v399 = vshrl.u32 %v398, 7
    %v400 = vsub.s32 0, %v399
    %v401 = vrot.slane %v88, %v400
    %v402 = vlaneseq
    %v403 = vshrl.u32 %v402, 7
    %v404 = vsub.s32 1, %v403
    %v405 = vrot.slane %v88, %v404
    %408 = vmatprep.subr.bf16.mxu0 %v334
    %409 = vmatpush1.bf16.msra.mxu0 %v333
    %410 = vmatprep.subr.bf16.mxu0 %v336
    %411 = vmatpush1.bf16.msra.mxu0 %v335
    %412 = vmatprep.subr.bf16.mxu0 %v338
    %413 = vmatpush1.bf16.msra.mxu0 %v337
    %414 = vmatprep.subr.bf16.mxu0 %v340
    %415 = vmatpush1.bf16.msra.mxu0 %v339
    %416 = vmatprep.subr.bf16.mxu0 %v342
    %417 = vmatpush1.bf16.msra.mxu0 %v341
    %418 = vmatprep.subr.bf16.mxu0 %v344
    %419 = vmatpush1.bf16.msra.mxu0 %v343
    %420 = vmatprep.subr.bf16.mxu0 %v346
    %421 = vmatpush1.bf16.msra.mxu0 %v345
    %422 = vmatprep.subr.bf16.mxu0 %v348
    %423 = vmatpush1.bf16.msra.mxu0 %v347
    %424 = vmatprep.subr.bf16.mxu0 %v350
    %425 = vmatpush1.bf16.msra.mxu0 %v349
    %426 = vmatprep.subr.bf16.mxu0 %v352
    %427 = vmatpush1.bf16.msra.mxu0 %v351
    %428 = vmatprep.subr.bf16.mxu0 %v354
    %429 = vmatpush1.bf16.msra.mxu0 %v353
    %430 = vmatprep.subr.bf16.mxu0 %v356
    %431 = vmatpush1.bf16.msra.mxu0 %v355
    %432 = vmatprep.subr.bf16.mxu0 %v358
    %433 = vmatpush1.bf16.msra.mxu0 %v357
    %434 = vmatprep.subr.bf16.mxu0 %v360
    %435 = vmatpush1.bf16.msra.mxu0 %v359
    %436 = vmatprep.subr.bf16.mxu0 %v362
    %437 = vmatpush1.bf16.msra.mxu0 %v361
    %438 = vmatprep.subr.bf16.mxu0 %v364
    %439 = vmatpush1.bf16.msra.mxu0 %v363
    %440 = vmatprep.mubr.bf16.mxu0 %v236
    %441 = vmatmul.mubr.bf16.gmra.mrb[0].mxu0 %v235
    %v442 = vpop.f32.mrb[0].mxu0
    %v443 = vadd.f32 %v401, %v442
    %v444 = vpop.f32.mrb[0].mxu0
    %v445 = vadd.f32 %v405, %v444
    %v446 = vpop.f32.mrb[0].mxu0
    %v447 = vpop.f32.mrb[0].mxu0
    %448 = vdwg.mxu0
    %v449 = vlaneseq
    %v450 = vshrl.u32 %v449, 7
    %v451 = vsub.s32 0, %v450
    %v452 = vrot.slane %v443, %v451
    %v453 = vlaneseq
    %v454 = vshrl.u32 %v453, 7
    %v455 = vsub.s32 0, %v454
    %v456 = vrot.slane %v445, %v455
    %v457 = vadd.f32 %v86, %v452
    %v458 = vadd.f32 %v87, %v456
    %v459 = vadd.f32 %v457, %v458
    %460 = vadd.xlane.f32.xlu0 %v459
    %v461 = vpop.xlane.xlu0 %460
    %v462 = vrcp.pop 256.0
    %v463 = vmul.f32 %v461, %v462
    %v464 = vsub.f32 %v457, %v463
    %v465 = vsub.f32 %v458, %v463
    %v466 = vmul.f32 %v464, %v464
    %v467 = vmul.f32 %v465, %v465
    %v468 = vadd.f32 %v466, %v467
    %469 = vadd.xlane.f32.xlu0 %v468
    %v470 = vpop.xlane.xlu0 %469
    %v471 = vmul.f32 %v470, %v462
    %v472 = vadd.f32 %v471, 1e-05
    %v473 = vrsqrt.pop %v472
    %v474 = vmul.f32 %v464, %v473
    %v475 = vmul.f32 %v465, %v473
    %v477 = vlaneseq
    %v478 = vshrl.u32 %v477, 7
    %v479 = vsub.s32 0, %v478
    %v480 = vrot.slane %v96, %v479
    %v481 = vlaneseq
    %v482 = vshrl.u32 %v481, 7
    %v483 = vsub.s32 1, %v482
    %v484 = vrot.slane %v96, %v483
    %v487 = vmul.f32 %v474, %v480
    %v488 = vmul.f32 %v475, %v484
    %v490 = vlaneseq
    %v491 = vshrl.u32 %v490, 7
    %v492 = vsub.s32 0, %v491
    %v493 = vrot.slane %v98, %v492
    %v494 = vlaneseq
    %v495 = vshrl.u32 %v494, 7
    %v496 = vsub.s32 1, %v495
    %v497 = vrot.slane %v98, %v496
    %v500 = vadd.f32 %v487, %v493
    %v501 = vadd.f32 %v488, %v497
    %v502 = vpack.c.bf16 %v500, %v500
    %v503 = vpack.c.bf16 %v501, %v501
    %v536 = vunpack.c.l.b16 %v139
    %v537 = vunpack.c.l.b16 %v140
    %v538 = vunpack.c.l.b16 %v141
    %v539 = vunpack.c.l.b16 %v142
    %v540 = vunpack.c.l.b16 %v143
    %v541 = vunpack.c.l.b16 %v144
    %v542 = vunpack.c.l.b16 %v145
    %v543 = vunpack.c.l.b16 %v146
    %v544 = vunpack.c.l.b16 %v147
    %v545 = vunpack.c.l.b16 %v148
    %v546 = vunpack.c.l.b16 %v149
    %v547 = vunpack.c.l.b16 %v150
    %v548 = vunpack.c.l.b16 %v151
    %v549 = vunpack.c.l.b16 %v152
    %v550 = vunpack.c.l.b16 %v153
    %v551 = vunpack.c.l.b16 %v154
    %v552 = vunpack.c.l.b16 %v155
    %v553 = vunpack.c.l.b16 %v156
    %v554 = vunpack.c.l.b16 %v157
    %v555 = vunpack.c.l.b16 %v158
    %v556 = vunpack.c.l.b16 %v159
    %v557 = vunpack.c.l.b16 %v160
    %v558 = vunpack.c.l.b16 %v161
    %v559 = vunpack.c.l.b16 %v162
    %v560 = vunpack.c.l.b16 %v163
    %v561 = vunpack.c.l.b16 %v164
    %v562 = vunpack.c.l.b16 %v165
    %v563 = vunpack.c.l.b16 %v166
    %v564 = vunpack.c.l.b16 %v167
    %v565 = vunpack.c.l.b16 %v168
    %v566 = vunpack.c.l.b16 %v169
    %v567 = vunpack.c.l.b16 %v170
    %v568 = vpack.c.b16 %v537, %v536
    %v569 = vpack.c.b16 %v539, %v538
    %v570 = vpack.c.b16 %v541, %v540
    %v571 = vpack.c.b16 %v543, %v542
    %v572 = vpack.c.b16 %v545, %v544
    %v573 = vpack.c.b16 %v547, %v546
    %v574 = vpack.c.b16 %v549, %v548
    %v575 = vpack.c.b16 %v551, %v550
    %v576 = vpack.c.b16 %v553, %v552
    %v577 = vpack.c.b16 %v555, %v554
    %v578 = vpack.c.b16 %v557, %v556
    %v579 = vpack.c.b16 %v559, %v558
    %v580 = vpack.c.b16 %v561, %v560
    %v581 = vpack.c.b16 %v563, %v562
    %v582 = vpack.c.b16 %v565, %v564
    %v583 = vpack.c.b16 %v567, %v566
    %600 = vmatprep.subr.bf16.mxu0 0
    %601 = vmatpush1.bf16.msra.mxu0 %v568
    %602 = vmatprep.subr.bf16.mxu0 0
    %603 = vmatpush1.bf16.msra.mxu0 %v569
    %604 = vmatprep.subr.bf16.mxu0 0
    %605 = vmatpush1.bf16.msra.mxu0 %v570
    %606 = vmatprep.subr.bf16.mxu0 0
    %607 = vmatpush1.bf16.msra.mxu0 %v571
    %608 = vmatprep.subr.bf16.mxu0 0
    %609 = vmatpush1.bf16.msra.mxu0 %v572
    %610 = vmatprep.subr.bf16.mxu0 0
    %611 = vmatpush1.bf16.msra.mxu0 %v573
    %612 = vmatprep.subr.bf16.mxu0 0
    %613 = vmatpush1.bf16.msra.mxu0 %v574
    %614 = vmatprep.subr.bf16.mxu0 0
    %615 = vmatpush1.bf16.msra.mxu0 %v575
    %616 = vmatprep.subr.bf16.mxu0 0
    %617 = vmatpush1.bf16.msra.mxu0 %v576
    %618 = vmatprep.subr.bf16.mxu0 0
    %619 = vmatpush1.bf16.msra.mxu0 %v577
    %620 = vmatprep.subr.bf16.mxu0 0
    %621 = vmatpush1.bf16.msra.mxu0 %v578
    %622 = vmatprep.subr.bf16.mxu0 0
    %623 = vmatpush1.bf16.msra.mxu0 %v579
    %624 = vmatprep.subr.bf16.mxu0 0
    %625 = vmatpush1.bf16.msra.mxu0 %v580
    %626 = vmatprep.subr.bf16.mxu0 0
    %627 = vmatpush1.bf16.msra.mxu0 %v581
    %628 = vmatprep.subr.bf16.mxu0 0
    %629 = vmatpush1.bf16.msra.mxu0 %v582
    %630 = vmatprep.subr.bf16.mxu0 0
    %631 = vmatpush1.bf16.msra.mxu0 %v583
    %632 = vmatprep.mubr.bf16.mxu0 %v503
    %633 = vmatmul.mubr.bf16.gmra.mrb[0].mxu0 %v502
    %v634 = vpop.f32.mrb[0].mxu0
    %v635 = vadd.f32 %v89, %v634
    %v636 = vpop.f32.mrb[0].mxu0
    %v637 = vpop.f32.mrb[0].mxu0
    %v638 = vpop.f32.mrb[0].mxu0
    %639 = vdwg.mxu0
    %v640 = vmax.f32 %v635, 0.0
    %v641 = vpack.c.bf16 %v640, %v640
    %v643 = vlaneseq
    %v644 = vshrl.u32 %v643, 7
    %v645 = vsub.s32 0, %v644
    %v646 = vrot.slane %v91, %v645
    %v647 = vlaneseq
    %v648 = vshrl.u32 %v647, 7
    %v649 = vsub.s32 1, %v648
    %v650 = vrot.slane %v91, %v649
    %v669 = vunpack.c.l.b16 %v203
    %v670 = vunpack.c.h.b16 %v203
    %v671 = vunpack.c.l.b16 %v204
    %v672 = vunpack.c.h.b16 %v204
    %v673 = vunpack.c.l.b16 %v205
    %v674 = vunpack.c.h.b16 %v205
    %v675 = vunpack.c.l.b16 %v206
    %v676 = vunpack.c.h.b16 %v206
    %v677 = vunpack.c.l.b16 %v207
    %v678 = vunpack.c.h.b16 %v207
    %v679 = vunpack.c.l.b16 %v208
    %v680 = vunpack.c.h.b16 %v208
    %v681 = vunpack.c.l.b16 %v209
    %v682 = vunpack.c.h.b16 %v209
    %v683 = vunpack.c.l.b16 %v210
    %v684 = vunpack.c.h.b16 %v210
    %v685 = vunpack.c.l.b16 %v211
    %v686 = vunpack.c.h.b16 %v211
    %v687 = vunpack.c.l.b16 %v212
    %v688 = vunpack.c.h.b16 %v212
    %v689 = vunpack.c.l.b16 %v213
    %v690 = vunpack.c.h.b16 %v213
    %v691 = vunpack.c.l.b16 %v214
    %v692 = vunpack.c.h.b16 %v214
    %v693 = vunpack.c.l.b16 %v215
    %v694 = vunpack.c.h.b16 %v215
    %v695 = vunpack.c.l.b16 %v216
    %v696 = vunpack.c.h.b16 %v216
    %v697 = vunpack.c.l.b16 %v217
    %v698 = vunpack.c.h.b16 %v217
    %v699 = vunpack.c.l.b16 %v218
    %v700 = vunpack.c.h.b16 %v218
    %v701 = vpack.c.b16 %v671, %v669
    %v702 = vpack.c.b16 %v672, %v670
    %v703 = vpack.c.b16 %v675, %v673
    %v704 = vpack.c.b16 %v676, %v674
    %v705 = vpack.c.b16 %v679, %v677
    %v706 = vpack.c.b16 %v680, %v678
    %v707 = vpack.c.b16 %v683, %v681
    %v708 = vpack.c.b16 %v684, %v682
    %v709 = vpack.c.b16 %v687, %v685
    %v710 = vpack.c.b16 %v688, %v686
    %v711 = vpack.c.b16 %v691, %v689
    %v712 = vpack.c.b16 %v692, %v690
    %v713 = vpack.c.b16 %v695, %v693
    %v714 = vpack.c.b16 %v696, %v694
    %v715 = vpack.c.b16 %v699, %v697
    %v716 = vpack.c.b16 %v700, %v698
    %733 = vmatprep.subr.bf16.mxu0 %v702
    %734 = vmatpush1.bf16.msra.mxu0 %v701
    %735 = vmatprep.subr.bf16.mxu0 %v704
    %736 = vmatpush1.bf16.msra.mxu0 %v703
    %737 = vmatprep.subr.bf16.mxu0 %v706
    %738 = vmatpush1.bf16.msra.mxu0 %v705
    %739 = vmatprep.subr.bf16.mxu0 %v708
    %740 = vmatpush1.bf16.msra.mxu0 %v707
    %741 = vmatprep.subr.bf16.mxu0 %v710
    %742 = vmatpush1.bf16.msra.mxu0 %v709
    %743 = vmatprep.subr.bf16.mxu0 %v712
    %744 = vmatpush1.bf16.msra.mxu0 %v711
    %745 = vmatprep.subr.bf16.mxu0 %v714
    %746 = vmatpush1.bf16.msra.mxu0 %v713
    %747 = vmatprep.subr.bf16.mxu0 %v716
    %748 = vmatpush1.bf16.msra.mxu0 %v715
    %749 = vmatprep.subr.bf16.mxu0 0
    %750 = vmatpush1.bf16.msra.mxu0 0
    %751 = vmatprep.subr.bf16.mxu0 0
    %752 = vmatpush1.bf16.msra.mxu0 0
    %753 = vmatprep.subr.bf16.mxu0 0
    %754 = vmatpush1.bf16.msra.mxu0 0
    %755 = vmatprep.subr.bf16.mxu0 0
    %756 = vmatpush1.bf16.msra.mxu0 0
    %757 = vmatprep.subr.bf16.mxu0 0
    %758 = vmatpush1.bf16.msra.mxu0 0
    %759 = vmatprep.subr.bf16.mxu0 0
    %760 = vmatpush1.bf16.msra.mxu0 0
    %761 = vmatprep.subr.bf16.mxu0 0
    %762 = vmatpush1.bf16.msra.mxu0 0
    %763 = vmatprep.subr.bf16.mxu0 0
    %764 = vmatpush1.bf16.msra.mxu0 0
    %765 = vmatprep.mubr.bf16.mxu0 0
    %766 = vmatmul.mubr.bf16.gmra.mrb[0].mxu0 %v641
    %v767 = vpop.f32.mrb[0].mxu0
    %v768 = vadd.f32 %v646, %v767
    %v769 = vpop.f32.mrb[0].mxu0
    %v770 = vadd.f32 %v650, %v769
    %v771 = vpop.f32.mrb[0].mxu0
    %v772 = vpop.f32.mrb[0].mxu0
    %773 = vdwg.mxu0
    %v774 = vadd.f32 %v500, %v768
    %v775 = vadd.f32 %v501, %v770
    %v776 = vadd.f32 %v774, %v775
    %777 = vadd.xlane.f32.xlu0 %v776
    %v778 = vpop.xlane.xlu0 %777
    %v779 = vmul.f32 %v778, %v462
    %v780 = vsub.f32 %v774, %v779
    %v781 = vsub.f32 %v775, %v779
    %v782 = vmul.f32 %v780, %v780
    %v783 = vmul.f32 %v781, %v781
    %v784 = vadd.f32 %v782, %v783
    %785 = vadd.xlane.f32.xlu0 %v784
    %v786 = vpop.xlane.xlu0 %785
    %v787 = vmul.f32 %v786, %v462
    %v788 = vadd.f32 %v787, 1e-05
    %v789 = vrsqrt.pop %v788
    %v790 = vmul.f32 %v780, %v789
    %v791 = vmul.f32 %v781, %v789
    %v793 = vlaneseq
    %v794 = vshrl.u32 %v793, 7
    %v795 = vsub.s32 0, %v794
    %v796 = vrot.slane %v100, %v795
    %v797 = vlaneseq
    %v798 = vshrl.u32 %v797, 7
    %v799 = vsub.s32 1, %v798
    %v800 = vrot.slane %v100, %v799
    %v803 = vmul.f32 %v790, %v796
    %v804 = vmul.f32 %v791, %v800
    %v806 = vlaneseq
    %v807 = vshrl.u32 %v806, 7
    %v808 = vsub.s32 0, %v807
    %v809 = vrot.slane %v102, %v808
    %v810 = vlaneseq
    %v811 = vshrl.u32 %v810, 7
    %v812 = vsub.s32 1, %v811
    %v813 = vrot.slane %v102, %v812
    %v816 = vadd.f32 %v803, %v809
    %v817 = vadd.f32 %v804, %v813
    %v818 = vpack.c.bf16 %v816, %v816
    %v819 = vpack.c.bf16 %v817, %v817
    %v852 = vunpack.c.l.b16 %v171
    %v853 = vunpack.c.l.b16 %v172
    %v854 = vunpack.c.l.b16 %v173
    %v855 = vunpack.c.l.b16 %v174
    %v856 = vunpack.c.l.b16 %v175
    %v857 = vunpack.c.l.b16 %v176
    %v858 = vunpack.c.l.b16 %v177
    %v859 = vunpack.c.l.b16 %v178
    %v860 = vunpack.c.l.b16 %v179
    %v861 = vunpack.c.l.b16 %v180
    %v862 = vunpack.c.l.b16 %v181
    %v863 = vunpack.c.l.b16 %v182
    %v864 = vunpack.c.l.b16 %v183
    %v865 = vunpack.c.l.b16 %v184
    %v866 = vunpack.c.l.b16 %v185
    %v867 = vunpack.c.l.b16 %v186
    %v868 = vunpack.c.l.b16 %v187
    %v869 = vunpack.c.l.b16 %v188
    %v870 = vunpack.c.l.b16 %v189
    %v871 = vunpack.c.l.b16 %v190
    %v872 = vunpack.c.l.b16 %v191
    %v873 = vunpack.c.l.b16 %v192
    %v874 = vunpack.c.l.b16 %v193
    %v875 = vunpack.c.l.b16 %v194
    %v876 = vunpack.c.l.b16 %v195
    %v877 = vunpack.c.l.b16 %v196
    %v878 = vunpack.c.l.b16 %v197
    %v879 = vunpack.c.l.b16 %v198
    %v880 = vunpack.c.l.b16 %v199
    %v881 = vunpack.c.l.b16 %v200
    %v882 = vunpack.c.l.b16 %v201
    %v883 = vunpack.c.l.b16 %v202
    %v884 = vpack.c.b16 %v853, %v852
    %v885 = vpack.c.b16 %v855, %v854
    %v886 = vpack.c.b16 %v857, %v856
    %v887 = vpack.c.b16 %v859, %v858
    %v888 = vpack.c.b16 %v861, %v860
    %v889 = vpack.c.b16 %v863, %v862
    %v890 = vpack.c.b16 %v865, %v864
    %v891 = vpack.c.b16 %v867, %v866
    %v892 = vpack.c.b16 %v869, %v868
    %v893 = vpack.c.b16 %v871, %v870
    %v894 = vpack.c.b16 %v873, %v872
    %v895 = vpack.c.b16 %v875, %v874
    %v896 = vpack.c.b16 %v877, %v876
    %v897 = vpack.c.b16 %v879, %v878
    %v898 = vpack.c.b16 %v881, %v880
    %v899 = vpack.c.b16 %v883, %v882
    %916 = vmatprep.subr.bf16.mxu0 0
    %917 = vmatpush1.bf16.msra.mxu0 %v884
    %918 = vmatprep.subr.bf16.mxu0 0
    %919 = vmatpush1.bf16.msra.mxu0 %v885
    %920 = vmatprep.subr.bf16.mxu0 0
    %921 = vmatpush1.bf16.msra.mxu0 %v886
    %922 = vmatprep.subr.bf16.mxu0 0
    %923 = vmatpush1.bf16.msra.mxu0 %v887
    %924 = vmatprep.subr.bf16.mxu0 0
    %925 = vmatpush1.bf16.msra.mxu0 %v888
    %926 = vmatprep.subr.bf16.mxu0 0
    %927 = vmatpush1.bf16.msra.mxu0 %v889
    %928 = vmatprep.subr.bf16.mxu0 0
    %929 = vmatpush1.bf16.msra.mxu0 %v890
    %930 = vmatprep.subr.bf16.mxu0 0
    %931 = vmatpush1.bf16.msra.mxu0 %v891
    %932 = vmatprep.subr.bf16.mxu0 0
    %933 = vmatpush1.bf16.msra.mxu0 %v892
    %934 = vmatprep.subr.bf16.mxu0 0
    %935 = vmatpush1.bf16.msra.mxu0 %v893
    %936 = vmatprep.subr.bf16.mxu0 0
    %937 = vmatpush1.bf16.msra.mxu0 %v894
    %938 = vmatprep.subr.bf16.mxu0 0
    %939 = vmatpush1.bf16.msra.mxu0 %v895
    %940 = vmatprep.subr.bf16.mxu0 0
    %941 = vmatpush1.bf16.msra.mxu0 %v896
    %942 = vmatprep.subr.bf16.mxu0 0
    %943 = vmatpush1.bf16.msra.mxu0 %v897
    %944 = vmatprep.subr.bf16.mxu0 0
    %945 = vmatpush1.bf16.msra.mxu0 %v898
    %946 = vmatprep.subr.bf16.mxu0 0
    %947 = vmatpush1.bf16.msra.mxu0 %v899
    %948 = vmatprep.mubr.bf16.mxu0 %v819
    %949 = vmatmul.mubr.bf16.gmra.mrb[0].mxu0 %v818
    %v950 = vpop.f32.mrb[0].mxu0
    %v951 = vadd.f32 %v92, %v950
    %v952 = vpop.f32.mrb[0].mxu0
    %v953 = vpop.f32.mrb[0].mxu0
    %v954 = vpop.f32.mrb[0].mxu0
    %955 = vdwg.mxu0
    %v956 = vmax.f32 %v951, 0.0
    %v957 = vpack.c.bf16 %v956, %v956
    %v959 = vlaneseq
    %v960 = vshrl.u32 %v959, 7
    %v961 = vsub.s32 0, %v960
    %v962 = vrot.slane %v94, %v961
    %v963 = vlaneseq
    %v964 = vshrl.u32 %v963, 7
    %v965 = vsub.s32 1, %v964
    %v966 = vrot.slane %v94, %v965
    %v985 = vunpack.c.l.b16 %v219
    %v986 = vunpack.c.h.b16 %v219
    %v987 = vunpack.c.l.b16 %v220
    %v988 = vunpack.c.h.b16 %v220
    %v989 = vunpack.c.l.b16 %v221
    %v990 = vunpack.c.h.b16 %v221
    %v991 = vunpack.c.l.b16 %v222
    %v992 = vunpack.c.h.b16 %v222
    %v993 = vunpack.c.l.b16 %v223
    %v994 = vunpack.c.h.b16 %v223
    %v995 = vunpack.c.l.b16 %v224
    %v996 = vunpack.c.h.b16 %v224
    %v997 = vunpack.c.l.b16 %v225
    %v998 = vunpack.c.h.b16 %v225
    %v999 = vunpack.c.l.b16 %v226
    %v1000 = vunpack.c.h.b16 %v226
    %v1001 = vunpack.c.l.b16 %v227
    %v1002 = vunpack.c.h.b16 %v227
    %v1003 = vunpack.c.l.b16 %v228
    %v1004 = vunpack.c.h.b16 %v228
    %v1005 = vunpack.c.l.b16 %v229
    %v1006 = vunpack.c.h.b16 %v229
    %v1007 = vunpack.c.l.b16 %v230
    %v1008 = vunpack.c.h.b16 %v230
    %v1009 = vunpack.c.l.b16 %v231
    %v1010 = vunpack.c.h.b16 %v231
    %v1011 = vunpack.c.l.b16 %v232
    %v1012 = vunpack.c.h.b16 %v232
    %v1013 = vunpack.c.l.b16 %v233
    %v1014 = vunpack.c.h.b16 %v233
    %v1015 = vunpack.c.l.b16 %v234
    %v1016 = vunpack.c.h.b16 %v234
    %v1017 = vpack.c.b16 %v987, %v985
    %v1018 = vpack.c.b16 %v988, %v986
    %v1019 = vpack.c.b16 %v991, %v989
    %v1020 = vpack.c.b16 %v992, %v990
    %v1021 = vpack.c.b16 %v995, %v993
    %v1022 = vpack.c.b16 %v996, %v994
    %v1023 = vpack.c.b16 %v999, %v997
    %v1024 = vpack.c.b16 %v1000, %v998
    %v1025 = vpack.c.b16 %v1003, %v1001
    %v1026 = vpack.c.b16 %v1004, %v1002
    %v1027 = vpack.c.b16 %v1007, %v1005
    %v1028 = vpack.c.b16 %v1008, %v1006
    %v1029 = vpack.c.b16 %v1011, %v1009
    %v1030 = vpack.c.b16 %v1012, %v1010
    %v1031 = vpack.c.b16 %v1015, %v1013
    %v1032 = vpack.c.b16 %v1016, %v1014
    %1049 = vmatprep.subr.bf16.mxu0 %v1018
    %1050 = vmatpush1.bf16.msra.mxu0 %v1017
    %1051 = vmatprep.subr.bf16.mxu0 %v1020
    %1052 = vmatpush1.bf16.msra.mxu0 %v1019
    %1053 = vmatprep.subr.bf16.mxu0 %v1022
    %1054 = vmatpush1.bf16.msra.mxu0 %v1021
    %1055 = vmatprep.subr.bf16.mxu0 %v1024
    %1056 = vmatpush1.bf16.msra.mxu0 %v1023
    %1057 = vmatprep.subr.bf16.mxu0 %v1026
    %1058 = vmatpush1.bf16.msra.mxu0 %v1025
    %1059 = vmatprep.subr.bf16.mxu0 %v1028
    %1060 = vmatpush1.bf16.msra.mxu0 %v1027
    %1061 = vmatprep.subr.bf16.mxu0 %v1030
    %1062 = vmatpush1.bf16.msra.mxu0 %v1029
    %1063 = vmatprep.subr.bf16.mxu0 %v1032
    %1064 = vmatpush1.bf16.msra.mxu0 %v1031
    %1065 = vmatprep.subr.bf16.mxu0 0
    %1066 = vmatpush1.bf16.msra.mxu0 0
    %1067 = vmatprep.subr.bf16.mxu0 0
    %1068 = vmatpush1.bf16.msra.mxu0 0
    %1069 = vmatprep.subr.bf16.mxu0 0
    %1070 = vmatpush1.bf16.msra.mxu0 0
    %1071 = vmatprep.subr.bf16.mxu0 0
    %1072 = vmatpush1.bf16.msra.mxu0 0
    %1073 = vmatprep.subr.bf16.mxu0 0
    %1074 = vmatpush1.bf16.msra.mxu0 0
    %1075 = vmatprep.subr.bf16.mxu0 0
    %1076 = vmatpush1.bf16.msra.mxu0 0
    %1077 = vmatprep.subr.bf16.mxu0 0
    %1078 = vmatpush1.bf16.msra.mxu0 0
    %1079 = vmatprep.subr.bf16.mxu0 0
    %1080 = vmatpush1.bf16.msra.mxu0 0
    %1081 = vmatprep.mubr.bf16.mxu0 0
    %1082 = vmatmul.mubr.bf16.gmra.mrb[0].mxu0 %v957
    %v1083 = vpop.f32.mrb[0].mxu0
    %v1084 = vadd.f32 %v962, %v1083
    %v1085 = vpop.f32.mrb[0].mxu0
    %v1086 = vadd.f32 %v966, %v1085
    %v1087 = vpop.f32.mrb[0].mxu0
    %v1088 = vpop.f32.mrb[0].mxu0
    %1089 = vdwg.mxu0
    %v1090 = vld [vmem:[#allocation5] sm:$0xff]
    %v1091 = vld [vmem:[#allocation5 + $0x8] sm:$0xff]
    %v1092 = vadd.f32 %v1090, %v1084
    %v1093 = vadd.f32 %v1091, %v1086
    %v1094 = vadd.f32 %v1092, %v1093
    %1095 = vadd.xlane.f32.xlu0 %v1094
    %v1096 = vpop.xlane.xlu0 %1095
    %v1097 = vmul.f32 %v1096, %v462
    %v1098 = vsub.f32 %v1092, %v1097
    %v1099 = vsub.f32 %v1093, %v1097
    %v1100 = vmul.f32 %v1098, %v1098
    %v1101 = vmul.f32 %v1099, %v1099
    %v1102 = vadd.f32 %v1100, %v1101
    %1103 = vadd.xlane.f32.xlu0 %v1102
    %v1104 = vpop.xlane.xlu0 %1103
    %v1105 = vmul.f32 %v1104, %v462
    %v1106 = vadd.f32 %v1105, 1e-05
    %v1107 = vrsqrt.pop %v1106
    %v1108 = vmul.f32 %v1098, %v1107
    %v1109 = vmul.f32 %v1099, %v1107
    %v1111 = vlaneseq
    %v1112 = vshrl.u32 %v1111, 7
    %v1113 = vsub.s32 0, %v1112
    %v1114 = vrot.slane %v104, %v1113
    %v1115 = vlaneseq
    %v1116 = vshrl.u32 %v1115, 7
    %v1117 = vsub.s32 1, %v1116
    %v1118 = vrot.slane %v104, %v1117
    %v1121 = vmul.f32 %v1108, %v1114
    %v1122 = vmul.f32 %v1109, %v1118
    %v1124 = vlaneseq
    %v1125 = vshrl.u32 %v1124, 7
    %v1126 = vsub.s32 0, %v1125
    %v1127 = vrot.slane %v106, %v1126
    %v1128 = vlaneseq
    %v1129 = vshrl.u32 %v1128, 7
    %v1130 = vsub.s32 1, %v1129
    %v1131 = vrot.slane %v106, %v1130
    %v1134 = vadd.f32 %v1121, %v1127
    %v1135 = vadd.f32 %v1122, %v1131
    %1136 = vst [vmem:[#allocation11] sm:$0xff] %v1134
    %1137 = vst [vmem:[#allocation11 + $0x8] sm:$0xff] %v1135
    // Predicated region
    $region42: #{tpu_custom_call.1} parent=1 // pred_check
      _
    $region43: #{tpu_custom_call.1} parent=1 // pred_check_branch
      %1139 = sbr.rel (0) target = $region45
    $region44: #{tpu_custom_call.1} parent=1 // pred_region
      %s1141 = ssub.s32 256, 256
      %1142 = vsyncadd [#allocation4], %s1141
      %s1144 = sshll.u32 [#allocation11], 4
      %s1145 = int_to_ptr.vmem [resolvable:$true] %s1144
      %1147 = dma.vmem_to_hbm [thread:$0]  %s1145, 256, %s5, [#allocation4]
    $region45: #{tpu_custom_call.1} parent=1 // pred_fallthru
      _
    // Predicated region
    $region46: #{tpu_custom_call.1} parent=1 // pred_check
      _
    $region47: #{tpu_custom_call.1} parent=1 // pred_check_branch
      %1149 = sbr.rel (0) target = $region49
    $region48: #{tpu_custom_call.1} parent=1 // pred_region
      %1150 = dma.done [#allocation4], 256
    $region49: #{tpu_custom_call.1} parent=1 // pred_fallthru
      _
    %1151 = vsyncpa [#allocation3], 1
    %1152 = vsyncpa [#allocation6], 1
    %1153 = vsyncpa [#allocation9], 1
    %1154 = vsyncpa [#allocation4], 1

</llo_original>
